<compile_context>
chip_gen: v7x
topology: tpu7x:2x2x1
jax: 0.10.0
libtpu: 0.0.40
codegen_flags: <defaults>
</compile_context>

<pallas_src>
import jax
import jax.numpy as jnp
from jax.experimental import pallas as pl
from jax.experimental.pallas import tpu as pltpu


# ----------------------------- kernels -----------------------------

def ffn_kernel_resident(x_ref, w1_ref, b1_ref, w2_ref, b2_ref, o_ref):
    # Full W1/W2 resident in VMEM (constant index_maps); 1-D grid over token tiles.
    x = x_ref[...]
    h = jnp.dot(x, w1_ref[...], preferred_element_type=jnp.float32)
    h = jnp.maximum(h + b1_ref[...], 0.0)                       # bias + ReLU in f32
    # Dropout(p=0.0) == identity, nothing to emit.
    y = jnp.dot(h.astype(w2_ref.dtype), w2_ref[...],
                preferred_element_type=jnp.float32)
    o_ref[...] = (y + b2_ref[...]).astype(o_ref.dtype)


def ffn_kernel_chunked_acc_out(x_ref, w1_ref, b1_ref, w2_ref, b2_ref, o_ref):
    # Hidden axis streamed over grid axis 1; o_ref is f32 and doubles as the accumulator
    # (it stays resident across k because its index_map is constant in k).
    k = pl.program_id(1)

    @pl.when(k == 0)
    def _init():
        o_ref[...] = jnp.broadcast_to(b2_ref[...], o_ref.shape)

    x = x_ref[...]
    h = jnp.dot(x, w1_ref[...], preferred_element_type=jnp.float32)
    h = jnp.maximum(h + b1_ref[...], 0.0)
    o_ref[...] += jnp.dot(h.astype(w2_ref.dtype), w2_ref[...],
                          preferred_element_type=jnp.float32)


def ffn_kernel_chunked_scratch(x_ref, w1_ref, b1_ref, w2_ref, b2_ref, o_ref, acc_ref):
    # Hidden axis streamed; f32 scratch accumulator for narrower output dtypes.
    k = pl.program_id(1)

    @pl.when(k == 0)
    def _init():
        acc_ref[...] = jnp.zeros_like(acc_ref)

    x = x_ref[...]
    h = jnp.dot(x, w1_ref[...], preferred_element_type=jnp.float32)
    h = jnp.maximum(h + b1_ref[...], 0.0)
    acc_ref[...] += jnp.dot(h.astype(w2_ref.dtype), w2_ref[...],
                            preferred_element_type=jnp.float32)

    @pl.when(k == pl.num_programs(1) - 1)
    def _finalize():
        o_ref[...] = (acc_ref[...] + b2_ref[...]).astype(o_ref.dtype)


# ----------------------------- wrapper -----------------------------

def _vmem_budget_bytes():
    """Per-generation VMEM budget with headroom for compiler-internal scratch."""
    try:
        cap = pltpu.get_tpu_info().vmem_capacity_bytes
    except Exception:
        cap = 64 * 1024 * 1024          # conservative: v7x per-TC VMEM
    return int(cap * 3 // 4)            # 96 MiB on v5e/v6e, 48 MiB on v7x


def _pick_hidden_chunk(hidden, target=1024):
    """Largest multiple of 128 that divides `hidden`, capped at `target`."""
    cand = (min(target, hidden) // 128) * 128
    while cand >= 128:
        if hidden % cand == 0:
            return cand
        cand -= 128
    # TODO(synk): hidden sizes with no multiple-of-128 divisor fall back to the full
    # hidden width (correct; pad hidden if this ever exceeds the VMEM budget).
    return hidden


def feed_forward(x2d, w1, b1, w2, b2, *, out_dtype=None, tm=512, th=None,
                 vmem_limit_bytes=None):
    """x2d: (M, dim) -> (M, dim). Weights stored (in_features, out_features) == torch weight.T.
    Biases b1 (1, hidden) / b2 (1, dim) are kept in float32."""
    M, dim = x2d.shape
    hidden = w1.shape[1]
    out_dtype = x2d.dtype if out_dtype is None else jnp.dtype(out_dtype)

    in_size = jnp.dtype(x2d.dtype).itemsize
    w_size = jnp.dtype(w1.dtype).itemsize
    out_size = jnp.dtype(out_dtype).itemsize
    budget = _vmem_budget_bytes() if vmem_limit_bytes is None else int(vmem_limit_bytes)

    # Token tile: rounded to the dtype's packed sublane multiple (8 f32, 16 bf16, 32 i8),
    # clamped for small M; rows padded so the grid covers M with full tiles.
    sub = 8 * max(1, 4 // in_size)
    tm_eff = min(tm, pl.cdiv(M, sub) * sub)
    m_pad = pl.cdiv(M, tm_eff) * tm_eff
    if m_pad != M:
        x2d = jnp.pad(x2d, ((0, m_pad - M), (0, 0)))
    n_i = m_pad // tm_eff   # on v7x, an even i-tile count keeps both TensorCores busy

    cost = pl.CostEstimate(
        flops=4 * m_pad * dim * hidden,
        transcendentals=0,
        bytes_accessed=(m_pad * dim * (in_size + out_size)
                        + 2 * dim * hidden * w_size + (hidden + dim) * 4))

    common = dict(out_shape=jax.ShapeDtypeStruct((m_pad, dim), out_dtype),
                  cost_estimate=cost)

    # --- Path 1: weight residency (1-D grid) when everything fits the VMEM budget ---
    resident_bytes = (
        2 * tm_eff * dim * in_size            # x tile (double-buffered)
        + 2 * tm_eff * dim * out_size         # out tile (double-buffered)
        + 2 * 2 * dim * hidden * w_size       # W1 + W2 (counted x2, conservative)
        + 2 * (hidden + dim) * 4              # biases (f32)
        + tm_eff * hidden * 4)                # f32 hidden activation
    if th is None and resident_bytes <= budget:
        out = pl.pallas_call(
            ffn_kernel_resident,
            grid_spec=pltpu.PrefetchScalarGridSpec(
                num_scalar_prefetch=0,
                grid=(n_i,),
                in_specs=[
                    pl.BlockSpec((tm_eff, dim), lambda i: (i, 0)),   # activations tile
                    pl.BlockSpec((dim, hidden), lambda i: (0, 0)),   # W1 (resident)
                    pl.BlockSpec((1, hidden), lambda i: (0, 0)),     # b1 (f32)
                    pl.BlockSpec((hidden, dim), lambda i: (0, 0)),   # W2 (resident)
                    pl.BlockSpec((1, dim), lambda i: (0, 0)),        # b2 (f32)
                ],
                out_specs=pl.BlockSpec((tm_eff, dim), lambda i: (i, 0)),
            ),
            compiler_params=pltpu.CompilerParams(
                dimension_semantics=("parallel",),
                vmem_limit_bytes=budget),
            **common,
        )(x2d, w1, b1, w2, b2)
        return out[:M] if m_pad != M else out

    # --- Path 2: stream the hidden axis in chunks (inner "arbitrary" grid axis) ---
    th_eff = th if th is not None else _pick_hidden_chunk(hidden)
    if hidden % th_eff != 0:
        th_eff = hidden

    acc_in_out = out_dtype == jnp.dtype(jnp.float32)
    kernel = ffn_kernel_chunked_acc_out if acc_in_out else ffn_kernel_chunked_scratch
    scratch = [] if acc_in_out else [pltpu.VMEM((tm_eff, dim), jnp.float32)]

    out = pl.pallas_call(
        kernel,
        grid_spec=pltpu.PrefetchScalarGridSpec(
            num_scalar_prefetch=0,
            grid=(n_i, hidden // th_eff),
            in_specs=[
                pl.BlockSpec((tm_eff, dim), lambda i, k: (i, 0)),    # activations tile
                pl.BlockSpec((dim, th_eff), lambda i, k: (0, k)),    # W1 hidden chunk
                pl.BlockSpec((1, th_eff), lambda i, k: (0, k)),      # b1 chunk (f32)
                pl.BlockSpec((th_eff, dim), lambda i, k: (k, 0)),    # W2 hidden chunk
                pl.BlockSpec((1, dim), lambda i, k: (0, 0)),         # b2 (f32)
            ],
            out_specs=pl.BlockSpec((tm_eff, dim), lambda i, k: (i, 0)),
            scratch_shapes=scratch,
        ),
        compiler_params=pltpu.CompilerParams(
            dimension_semantics=("parallel", "arbitrary"),
            vmem_limit_bytes=budget),
        **common,
    )(x2d, w1, b1, w2, b2)
    return out[:M] if m_pad != M else out


def feed_forward_module(x, params, compute_dtype=jnp.bfloat16):
    """x: (B, S, dim) -> (B, S, dim); matches nn.Sequential(Linear, ReLU, Dropout(0), Linear, Dropout(0)).

    MXU operands default to bf16 (f32 accumulation); biases stay f32 end-to-end;
    output dtype matches the input dtype."""
    B, S, dim = x.shape
    w1, b1, w2, b2 = params
    out_dtype = x.dtype
    if compute_dtype is not None:
        x = x.astype(compute_dtype)
        w1 = w1.astype(compute_dtype)
        w2 = w2.astype(compute_dtype)
    b1 = b1.astype(jnp.float32)
    b2 = b2.astype(jnp.float32)
    y2d = feed_forward(x.reshape(B * S, dim), w1, b1, w2, b2, out_dtype=out_dtype)
    return y2d.reshape(B, S, dim)


def init_params(key, dim, hidden_dim, dtype=jnp.float32):
    # Deterministic init mimicking nn.Linear's uniform(-1/sqrt(fan_in), 1/sqrt(fan_in)).
    k1, k2, k3, k4 = jax.random.split(key, 4)
    s1 = 1.0 / jnp.sqrt(dim)
    s2 = 1.0 / jnp.sqrt(hidden_dim)
    # Stored as (in_features, out_features) == PyTorch weight.T
    w1 = jax.random.uniform(k1, (dim, hidden_dim), dtype, -s1, s1)
    b1 = jax.random.uniform(k2, (1, hidden_dim), dtype, -s1, s1)
    w2 = jax.random.uniform(k3, (hidden_dim, dim), dtype, -s2, s2)
    b2 = jax.random.uniform(k4, (1, dim), dtype, -s2, s2)
    return w1, b1, w2, b2


if __name__ == "__main__":
    B, S, dim, hidden_dim = 2, 8, 32, 64
    key = jax.random.PRNGKey(0)
    kx, kp = jax.random.split(key)
    x = jax.random.normal(kx, (B, S, dim), jnp.float32)
    params = init_params(kp, dim, hidden_dim)
    w1, b1, w2, b2 = params

    # Reference (same math as the PyTorch module with dropout=0).
    ref = jnp.maximum(x @ w1 + b1[0], 0.0) @ w2 + b2[0]

    # 1) f32 path (exact) -- exercises the weight-resident kernel.
    out_f32 = jax.block_until_ready(feed_forward_module(x, params, compute_dtype=jnp.float32))
    assert out_f32.shape == (B, S, dim)
    assert jnp.allclose(out_f32, ref, atol=1e-4, rtol=1e-4)

    # 2) default bf16-operand / f32-accumulate path (recommended on all generations).
    out_bf = jax.block_until_ready(feed_forward_module(x, params))
    assert out_bf.dtype == x.dtype
    assert jnp.allclose(out_bf, ref, atol=1e-1, rtol=1e-1)

    # 3) token count not a multiple of the tile (ViT-like 197 tokens): cdiv + padding path.
    x_odd = jax.random.normal(jax.random.PRNGKey(1), (1, 197, dim), jnp.float32)
    ref_odd = jnp.maximum(x_odd @ w1 + b1[0], 0.0) @ w2 + b2[0]
    out_odd = jax.block_until_ready(feed_forward_module(x_odd, params, compute_dtype=jnp.float32))
    assert out_odd.shape == (1, 197, dim)
    assert jnp.allclose(out_odd, ref_odd, atol=1e-4, rtol=1e-4)

    # 4) hidden-streaming fallback (forced via th) with f32 output: accumulates into o_ref.
    dim2, hid2 = 128, 256
    w1b, b1b, w2b, b2b = init_params(jax.random.PRNGKey(2), dim2, hid2)
    x2 = jax.random.normal(jax.random.PRNGKey(3), (16, dim2), jnp.float32)
    ref2 = jnp.maximum(x2 @ w1b + b1b[0], 0.0) @ w2b + b2b[0]
    out2 = jax.block_until_ready(
        feed_forward(x2, w1b, b1b, w2b, b2b, th=128))
    assert jnp.allclose(out2, ref2, atol=1e-4, rtol=1e-4)

    # 5) hidden-streaming fallback with a narrow (bf16) output: f32 scratch accumulator.
    out3 = jax.block_until_ready(
        feed_forward(x2.astype(jnp.bfloat16),
                     w1b.astype(jnp.bfloat16), b1b,
                     w2b.astype(jnp.bfloat16), b2b, th=128))
    assert out3.dtype == jnp.bfloat16
    assert jnp.allclose(out3.astype(jnp.float32), ref2, atol=2e-1, rtol=2e-1)

    print("KERNEL_OK")
</pallas_src>

<mosaic_0001>
module attributes {stable_mosaic.version = 11 : i64} {
  func.func @ffn_kernel_resident(%arg0: i32, %arg1: memref<16x32xf32, #tpu.memory_space<vmem>>, %arg2: memref<32x64xf32, #tpu.memory_space<vmem>>, %arg3: memref<1x64xf32, #tpu.memory_space<vmem>>, %arg4: memref<64x32xf32, #tpu.memory_space<vmem>>, %arg5: memref<1x32xf32, #tpu.memory_space<vmem>>, %arg6: memref<16x32xf32, #tpu.memory_space<vmem>>) attributes {dimension_semantics = [#tpu.dimension_semantics<parallel>], iteration_bounds = array<i64: 1>, scalar_prefetch = 0 : i64, scratch_operands = 0 : i64, tpu.core_type = #tpu.core_type<tc>, window_params = [{transform_indices = @transform_0, window_bounds = array<i64: 16, 32>}, {pipeline_mode = #tpu.pipeline_mode<synchronous>, transform_indices = @transform_1, window_bounds = array<i64: 32, 64>}, {pipeline_mode = #tpu.pipeline_mode<synchronous>, transform_indices = @transform_2, window_bounds = array<i64: 1, 64>}, {pipeline_mode = #tpu.pipeline_mode<synchronous>, transform_indices = @transform_3, window_bounds = array<i64: 64, 32>}, {pipeline_mode = #tpu.pipeline_mode<synchronous>, transform_indices = @transform_4, window_bounds = array<i64: 1, 32>}, {transform_indices = @transform_5, window_bounds = array<i64: 16, 32>}]} {
    %c0 = arith.constant 0 : index
    %c0_0 = arith.constant 0 : index
    %0 = vector.load %arg1[%c0, %c0_0] : memref<16x32xf32, #tpu.memory_space<vmem>>, vector<16x32xf32>
    %c0_1 = arith.constant 0 : index
    %c0_2 = arith.constant 0 : index
    %1 = vector.load %arg2[%c0_1, %c0_2] : memref<32x64xf32, #tpu.memory_space<vmem>>, vector<32x64xf32>
    %cst = arith.constant dense<0.000000e+00> : vector<16x64xf32>
    %2 = tpu.matmul %0, %1, %cst {dimension_numbers = #tpu.dot_dimension_numbers<[1], [0], [0], [1], [0, 0, 1, 1], [], []>} : vector<16x32xf32>, vector<32x64xf32>, vector<16x64xf32> -> vector<16x64xf32>
    %c0_3 = arith.constant 0 : index
    %c0_4 = arith.constant 0 : index
    %3 = vector.load %arg3[%c0_3, %c0_4] : memref<1x64xf32, #tpu.memory_space<vmem>>, vector<1x64xf32>
    %4 = vector.broadcast %3 : vector<1x64xf32> to vector<16x64xf32>
    %5 = arith.addf %2, %4 : vector<16x64xf32>
    %cst_5 = arith.constant 0.000000e+00 : f32
    %6 = vector.broadcast %cst_5 : f32 to vector<16x64xf32>
    %7 = arith.maximumf %5, %6 : vector<16x64xf32>
    %c0_6 = arith.constant 0 : index
    %c0_7 = arith.constant 0 : index
    %8 = vector.load %arg4[%c0_6, %c0_7] : memref<64x32xf32, #tpu.memory_space<vmem>>, vector<64x32xf32>
    %cst_8 = arith.constant dense<0.000000e+00> : vector<16x32xf32>
    %9 = tpu.matmul %7, %8, %cst_8 {dimension_numbers = #tpu.dot_dimension_numbers<[1], [0], [0], [1], [0, 0, 1, 1], [], []>} : vector<16x64xf32>, vector<64x32xf32>, vector<16x32xf32> -> vector<16x32xf32>
    %c0_9 = arith.constant 0 : index
    %c0_10 = arith.constant 0 : index
    %10 = vector.load %arg5[%c0_9, %c0_10] : memref<1x32xf32, #tpu.memory_space<vmem>>, vector<1x32xf32>
    %11 = vector.broadcast %10 : vector<1x32xf32> to vector<16x32xf32>
    %12 = arith.addf %9, %11 : vector<16x32xf32>
    %c0_11 = arith.constant 0 : index
    %c0_12 = arith.constant 0 : index
    %13 = vector.load %arg6[%c0_11, %c0_12] : memref<16x32xf32, #tpu.memory_space<vmem>>, vector<16x32xf32>
    tpu.vector_store %arg6[%c0_11, %c0_12], %12 {strides = array<i32>} : memref<16x32xf32, #tpu.memory_space<vmem>>, vector<16x32xf32>,
    return
  }
  func.func @transform_0(%arg0: i32) -> (i32, i32) {
    %c0_i32 = arith.constant 0 : i32
    %c0_i32_0 = arith.constant 0 : i32
    return %arg0, %c0_i32 : i32, i32
  }
  func.func @transform_1(%arg0: i32) -> (i32, i32) {
    %c0_i32 = arith.constant 0 : i32
    %c0_i32_0 = arith.constant 0 : i32
    %c0_i32_1 = arith.constant 0 : i32
    return %c0_i32, %c0_i32_0 : i32, i32
  }
  func.func @transform_2(%arg0: i32) -> (i32, i32) {
    %c0_i32 = arith.constant 0 : i32
    %c0_i32_0 = arith.constant 0 : i32
    %c0_i32_1 = arith.constant 0 : i32
    return %c0_i32, %c0_i32_0 : i32, i32
  }
  func.func @transform_3(%arg0: i32) -> (i32, i32) {
    %c0_i32 = arith.constant 0 : i32
    %c0_i32_0 = arith.constant 0 : i32
    %c0_i32_1 = arith.constant 0 : i32
    return %c0_i32, %c0_i32_0 : i32, i32
  }
  func.func @transform_4(%arg0: i32) -> (i32, i32) {
    %c0_i32 = arith.constant 0 : i32
    %c0_i32_0 = arith.constant 0 : i32
    %c0_i32_1 = arith.constant 0 : i32
    return %c0_i32, %c0_i32_0 : i32, i32
  }
  func.func @transform_5(%arg0: i32) -> (i32, i32) {
    %c0_i32 = arith.constant 0 : i32
    %c0_i32_0 = arith.constant 0 : i32
    return %arg0, %c0_i32 : i32, i32
  }
}

</mosaic_0001>

<llo_original>
// kernel: tpu_custom_call.1
$region0: #{tpu_custom_call.1}
  #allocation0 [shape = 'u32[]', space=smem, size = 0x4, offset = 0x4, fixed_abs, tag = 'smem constant byte address 0x4 - core index']
  #allocation1 [shape = 'u32[144,128]{1,0:T(1,128)}', space=vmem, size = 0x12000, scoped, tag = 'internal scratch']
  %s0 = inlined_call_operand.vmem [shape: f32[16,32], index: 0, kind: input, shape index: {}]
  %s1 = inlined_call_operand.vmem [shape: f32[32,64], index: 1, kind: input, shape index: {}]
  %s2 = inlined_call_operand.vmem [shape: f32[1,64], index: 2, kind: input, shape index: {}]
  %s3 = inlined_call_operand.vmem [shape: f32[64,32], index: 3, kind: input, shape index: {}]
  %s4 = inlined_call_operand.vmem [shape: f32[1,32], index: 4, kind: input, shape index: {}]
  %s5 = inlined_call_operand.hbm [shape: f32[16,32], index: 5, kind: output, shape index: {}]
  %s6 = sld [smem:[#allocation0]]
  $region30: #{tpu_custom_call.1} parent=0
    _
  %s8 = ssub.s32 1, %s6
  %s9 = scalar_select 0, %s8, %s6
  $region1: #{tpu_custom_call.1} parent=0
    #allocation2 [shape = 'u8[8192]{0}', space=vmem, size = 0x2000, scoped, tag = 'output window, operand 0, single buffered']
    #allocation3 [shape = 's32[1]{0}', space=sflag, size = 0x4, scoped, tag = 'scoped memory for tpu_custom_call.1']
    %10 = vsyncpa [#allocation3], 0
    // Predicated region
    $region2: #{tpu_custom_call.1} parent=1 // pred_check
      _
    $region3: #{tpu_custom_call.1} parent=1 // pred_check_branch
      %12 = sbr.rel (0) target = $region5
    $region4: #{tpu_custom_call.1} parent=1 // pred_region
      _
    $region5: #{tpu_custom_call.1} parent=1 // pred_fallthru
      _
    // Predicated region
    $region6: #{tpu_custom_call.1} parent=1 // pred_check
      _
    $region7: #{tpu_custom_call.1} parent=1 // pred_check_branch
      %14 = sbr.rel (0) target = $region9
    $region8: #{tpu_custom_call.1} parent=1 // pred_region
      _
    $region9: #{tpu_custom_call.1} parent=1 // pred_fallthru
      _
    // Predicated region
    $region10: #{tpu_custom_call.1} parent=1 // pred_check
      _
    $region11: #{tpu_custom_call.1} parent=1 // pred_check_branch
      %16 = sbr.rel (0) target = $region13
    $region12: #{tpu_custom_call.1} parent=1 // pred_region
      _
    $region13: #{tpu_custom_call.1} parent=1 // pred_fallthru
      _
    // Predicated region
    $region14: #{tpu_custom_call.1} parent=1 // pred_check
      _
    $region15: #{tpu_custom_call.1} parent=1 // pred_check_branch
      %18 = sbr.rel (0) target = $region17
    $region16: #{tpu_custom_call.1} parent=1 // pred_region
      _
    $region17: #{tpu_custom_call.1} parent=1 // pred_fallthru
      _
    // Predicated region
    $region18: #{tpu_custom_call.1} parent=1 // pred_check
      _
    $region19: #{tpu_custom_call.1} parent=1 // pred_check_branch
      %20 = sbr.rel (0) target = $region21
    $region20: #{tpu_custom_call.1} parent=1 // pred_region
      _
    $region21: #{tpu_custom_call.1} parent=1 // pred_fallthru
      _
    %v21 = vld [vmem:[%s0] sm:$0xff]
    %v22 = vld [vmem:[%s0 + $0x8] sm:$0xff]
    %v23 = vld [vmem:[%s1] sm:$0xff]
    %v24 = vld [vmem:[%s1 + $0x8] sm:$0xff]
    %v25 = vld [vmem:[%s1 + $0x10] sm:$0xff]
    %v26 = vld [vmem:[%s1 + $0x18] sm:$0xff]
    %v27 = vld [vmem:[%s2] sm:$0x1]
    %v29 = vlaneseq
    %v30 = vshrl.u32 %v29, 7
    %v31 = vsub.s32 0, %v30
    %v32 = vrot.slane %v27, %v31
    %vm34 = vcmask 261120
    %v36 = vsel %vm34, %v21, 0
    %v39 = vsel %vm34, %v22, 0
    %41 = vmatprep.subr.mxu0 0.0
    %42 = vmatpush1.msra.mxu0 %v23
    %43 = vmatprep.subr.mxu0 0.0
    %44 = vmatpush1.msra.mxu0 %v24
    %45 = vmatprep.subr.mxu0 0.0
    %46 = vmatpush1.msra.mxu0 %v25
    %47 = vmatprep.subr.mxu0 0.0
    %48 = vmatpush1.msra.mxu0 %v26
    %49 = vmatprep.subr.mxu0 0.0
    %50 = vmatpush1.msra.mxu0 0.0
    %51 = vmatprep.subr.mxu0 0.0
    %52 = vmatpush1.msra.mxu0 0.0
    %53 = vmatprep.subr.mxu0 0.0
    %54 = vmatpush1.msra.mxu0 0.0
    %55 = vmatprep.subr.mxu0 0.0
    %56 = vmatpush1.msra.mxu0 0.0
    %57 = vmatprep.subr.mxu0 0.0
    %58 = vmatpush1.msra.mxu0 0.0
    %59 = vmatprep.subr.mxu0 0.0
    %60 = vmatpush1.msra.mxu0 0.0
    %61 = vmatprep.subr.mxu0 0.0
    %62 = vmatpush1.msra.mxu0 0.0
    %63 = vmatprep.subr.mxu0 0.0
    %64 = vmatpush1.msra.mxu0 0.0
    %65 = vmatprep.subr.mxu0 0.0
    %66 = vmatpush1.msra.mxu0 0.0
    %67 = vmatprep.subr.mxu0 0.0
    %68 = vmatpush1.msra.mxu0 0.0
    %69 = vmatprep.subr.mxu0 0.0
    %70 = vmatpush1.msra.mxu0 0.0
    %71 = vmatprep.subr.mxu0 0.0
    %72 = vmatpush1.msra.mxu0 0.0
    %73 = vmatprep.subr.mxu0 0.0
    %74 = vmatpush1.msra.mxu0 0.0
    %75 = vmatprep.subr.mxu0 0.0
    %76 = vmatpush1.msra.mxu0 0.0
    %77 = vmatprep.subr.mxu0 0.0
    %78 = vmatpush1.msra.mxu0 0.0
    %79 = vmatprep.subr.mxu0 0.0
    %80 = vmatpush1.msra.mxu0 0.0
    %81 = vmatprep.subr.mxu0 0.0
    %82 = vmatpush1.msra.mxu0 0.0
    %83 = vmatprep.subr.mxu0 0.0
    %84 = vmatpush1.msra.mxu0 0.0
    %85 = vmatprep.subr.mxu0 0.0
    %86 = vmatpush1.msra.mxu0 0.0
    %87 = vmatprep.subr.mxu0 0.0
    %88 = vmatpush1.msra.mxu0 0.0
    %89 = vmatprep.subr.mxu0 0.0
    %90 = vmatpush1.msra.mxu0 0.0
    %91 = vmatprep.subr.mxu0 0.0
    %92 = vmatpush1.msra.mxu0 0.0
    %93 = vmatprep.subr.mxu0 0.0
    %94 = vmatpush1.msra.mxu0 0.0
    %95 = vmatprep.subr.mxu0 0.0
    %96 = vmatpush1.msra.mxu0 0.0
    %97 = vmatprep.subr.mxu0 0.0
    %98 = vmatpush1.msra.mxu0 0.0
    %99 = vmatprep.subr.mxu0 0.0
    %100 = vmatpush1.msra.mxu0 0.0
    %101 = vmatprep.subr.mxu0 0.0
    %102 = vmatpush1.msra.mxu0 0.0
    %103 = vmatprep.subr.mxu0 0.0
    %104 = vmatpush1.msra.mxu0 0.0
    %105 = vmatprep.mubr.f32.mxu0 0.0
    %106 = vmatmul.mubr.f32.gmra.mrb[0].mxu0 %v36
    %v107 = vpop.f32.mrb[0].mxu0
    %v108 = vadd.f32 %v32, %v107
    %v109 = vpop.f32.mrb[0].mxu0
    %110 = vmatprep.mubr.f32.mxu0 0.0
    %111 = vmatmul.mubr.f32.gmra.mrb[0].mxu0 %v39
    %v112 = vpop.f32.mrb[0].mxu0
    %v113 = vadd.f32 %v32, %v112
    %v114 = vpop.f32.mrb[0].mxu0
    %115 = vdwg.mxu0
    %v116 = vmax.f32 %v108, 0.0
    %v117 = vmax.f32 %v113, 0.0
    %v118 = vld [vmem:[%s3] sm:$0xff]
    %v119 = vld [vmem:[%s3 + $0x8] sm:$0xff]
    %v120 = vld [vmem:[%s3 + $0x10] sm:$0xff]
    %v121 = vld [vmem:[%s3 + $0x18] sm:$0xff]
    %v122 = vld [vmem:[%s3 + $0x20] sm:$0xff]
    %v123 = vld [vmem:[%s3 + $0x28] sm:$0xff]
    %v124 = vld [vmem:[%s3 + $0x30] sm:$0xff]
    %v125 = vld [vmem:[%s3 + $0x38] sm:$0xff]
    %v126 = vld [vmem:[%s4] sm:$0x1]
    %v128 = vlaneseq
    %v129 = vshrl.u32 %v128, 7
    %v130 = vsub.s32 0, %v129
    %v131 = vrot.slane %v126, %v130
    %vm133 = vcmask 523264
    %v135 = vsel %vm133, %v116, 0
    %v138 = vsel %vm133, %v117, 0
    %140 = vmatprep.subr.mxu0 0.0
    %141 = vmatpush1.msra.mxu0 %v118
    %142 = vmatprep.subr.mxu0 0.0
    %143 = vmatpush1.msra.mxu0 %v119
    %144 = vmatprep.subr.mxu0 0.0
    %145 = vmatpush1.msra.mxu0 %v120
    %146 = vmatprep.subr.mxu0 0.0
    %147 = vmatpush1.msra.mxu0 %v121
    %148 = vmatprep.subr.mxu0 0.0
    %149 = vmatpush1.msra.mxu0 %v122
    %150 = vmatprep.subr.mxu0 0.0
    %151 = vmatpush1.msra.mxu0 %v123
    %152 = vmatprep.subr.mxu0 0.0
    %153 = vmatpush1.msra.mxu0 %v124
    %154 = vmatprep.subr.mxu0 0.0
    %155 = vmatpush1.msra.mxu0 %v125
    %156 = vmatprep.subr.mxu0 0.0
    %157 = vmatpush1.msra.mxu0 0.0
    %158 = vmatprep.subr.mxu0 0.0
    %159 = vmatpush1.msra.mxu0 0.0
    %160 = vmatprep.subr.mxu0 0.0
    %161 = vmatpush1.msra.mxu0 0.0
    %162 = vmatprep.subr.mxu0 0.0
    %163 = vmatpush1.msra.mxu0 0.0
    %164 = vmatprep.subr.mxu0 0.0
    %165 = vmatpush1.msra.mxu0 0.0
    %166 = vmatprep.subr.mxu0 0.0
    %167 = vmatpush1.msra.mxu0 0.0
    %168 = vmatprep.subr.mxu0 0.0
    %169 = vmatpush1.msra.mxu0 0.0
    %170 = vmatprep.subr.mxu0 0.0
    %171 = vmatpush1.msra.mxu0 0.0
    %172 = vmatprep.subr.mxu0 0.0
    %173 = vmatpush1.msra.mxu0 0.0
    %174 = vmatprep.subr.mxu0 0.0
    %175 = vmatpush1.msra.mxu0 0.0
    %176 = vmatprep.subr.mxu0 0.0
    %177 = vmatpush1.msra.mxu0 0.0
    %178 = vmatprep.subr.mxu0 0.0
    %179 = vmatpush1.msra.mxu0 0.0
    %180 = vmatprep.subr.mxu0 0.0
    %181 = vmatpush1.msra.mxu0 0.0
    %182 = vmatprep.subr.mxu0 0.0
    %183 = vmatpush1.msra.mxu0 0.0
    %184 = vmatprep.subr.mxu0 0.0
    %185 = vmatpush1.msra.mxu0 0.0
    %186 = vmatprep.subr.mxu0 0.0
    %187 = vmatpush1.msra.mxu0 0.0
    %188 = vmatprep.subr.mxu0 0.0
    %189 = vmatpush1.msra.mxu0 0.0
    %190 = vmatprep.subr.mxu0 0.0
    %191 = vmatpush1.msra.mxu0 0.0
    %192 = vmatprep.subr.mxu0 0.0
    %193 = vmatpush1.msra.mxu0 0.0
    %194 = vmatprep.subr.mxu0 0.0
    %195 = vmatpush1.msra.mxu0 0.0
    %196 = vmatprep.subr.mxu0 0.0
    %197 = vmatpush1.msra.mxu0 0.0
    %198 = vmatprep.subr.mxu0 0.0
    %199 = vmatpush1.msra.mxu0 0.0
    %200 = vmatprep.subr.mxu0 0.0
    %201 = vmatpush1.msra.mxu0 0.0
    %202 = vmatprep.subr.mxu0 0.0
    %203 = vmatpush1.msra.mxu0 0.0
    %204 = vmatprep.mubr.f32.mxu0 0.0
    %205 = vmatmul.mubr.f32.gmra.mrb[0].mxu0 %v135
    %v206 = vpop.f32.mrb[0].mxu0
    %v207 = vadd.f32 %v131, %v206
    %v208 = vpop.f32.mrb[0].mxu0
    %209 = vmatprep.mubr.f32.mxu0 0.0
    %210 = vmatmul.mubr.f32.gmra.mrb[0].mxu0 %v138
    %v211 = vpop.f32.mrb[0].mxu0
    %v212 = vadd.f32 %v131, %v211
    %v213 = vpop.f32.mrb[0].mxu0
    %214 = vdwg.mxu0
    %215 = vst.msk [vmem:[#allocation2] sm:$0xff] %vm34, %v207
    %216 = vst.msk [vmem:[#allocation2 + $0x8] sm:$0xff] %vm34, %v212
    // Predicated region
    $region22: #{tpu_custom_call.1} parent=1 // pred_check
      _
    $region23: #{tpu_custom_call.1} parent=1 // pred_check_branch
      %218 = sbr.rel (0) target = $region25
    $region24: #{tpu_custom_call.1} parent=1 // pred_region
      %s220 = ssub.s32 256, 256
      %221 = vsyncadd [#allocation3], %s220
      %s222 = sshll.u32 [#allocation2], 4
      %s223 = int_to_ptr.vmem [resolvable:$true] %s222
      %228 = dma.vmem_to_hbm [thread:$0]  %s223, 256, %s5, [#allocation3], 128, 128, 8
    $region25: #{tpu_custom_call.1} parent=1 // pred_fallthru
      _
    // Predicated region
    $region26: #{tpu_custom_call.1} parent=1 // pred_check
      _
    $region27: #{tpu_custom_call.1} parent=1 // pred_check_branch
      %230 = sbr.rel (0) target = $region29
    $region28: #{tpu_custom_call.1} parent=1 // pred_region
      %231 = dma.done [#allocation3], 256
    $region29: #{tpu_custom_call.1} parent=1 // pred_fallthru
      _
    %232 = vsyncpa [#allocation3], 1

</llo_original>
